<compile_context>
chip_gen: v7x
topology: tpu7x:2x2x1
jax: 0.10.0
libtpu: 0.0.40
codegen_flags: <defaults>
</compile_context>

<pallas_src>
import jax
import jax.numpy as jnp
from jax.experimental import pallas as pl
from jax.experimental.pallas import tpu as pltpu


def _elementwise_kernel(x_ref, o1_ref, o2_ref, o3_ref, o4_ref):
    x = x_ref[...]
    o1_ref[...] = x + 2.0
    o2_ref[...] = x - 3.0
    o3_ref[...] = x * 4.0
    o4_ref[...] = x / 5.0  # exact divide; hidden under the HBM transfer


def _ceil_to(n, m):
    return -(-n // m) * m


def _pick_lane_width(n, max_lane=2048):
    """Largest divisor of n that is a multiple of 128 and <= max_lane (or None)."""
    if n % 128 != 0:
        return None
    m = n // 128
    best = 1
    d = 1
    while d * 128 <= max_lane:
        if m % d == 0:
            best = d
        d += 1
    return 128 * best


@jax.jit
def pt_module_forward(x):
    """Pallas equivalent of PtModule.forward: returns (x+2, x-3, x*4, x/5)."""
    orig_shape = x.shape
    n = x.size
    dtype = x.dtype
    itemsize = jnp.dtype(dtype).itemsize
    sub = max(8, 32 // itemsize)  # sublane multiple: 8 f32 / 16 bf16 / 32 int8

    flat = x.reshape(-1)

    lane_w = _pick_lane_width(n)
    padded = lane_w is None
    if padded:
        # Ragged fallback only (never taken for the test shape): a single input
        # pad + output slices. Costs extra HBM passes, so avoided when possible.
        n_pad = _ceil_to(n, 128)
        flat = jnp.pad(flat, (0, n_pad - n))
        lane_w = _pick_lane_width(n_pad)
    else:
        n_pad = n

    rows = n_pad // lane_w
    x2d = flat.reshape(rows, lane_w)  # metadata-only reshape on the clean path

    # ---- block sizing --------------------------------------------------------
    TARGET_BLOCK_BYTES = 2 * 1024 * 1024  # per buffer; x (1 in + 4 out) x 2 = 20 MiB
    MIN_GRID_STEPS = 4                    # keep the pipeline busy / feed both v7x TCs
    if rows <= sub:
        block_rows = rows                 # block equal to the full dim is legal
    else:
        cap_by_bytes = max(sub, (TARGET_BLOCK_BYTES // (itemsize * lane_w)) // sub * sub)
        cap_by_steps = max(sub, _ceil_to(-(-rows // MIN_GRID_STEPS), sub))
        block_rows = min(cap_by_bytes, cap_by_steps)

    grid = (-(-rows // block_rows),)      # cdiv; Pallas masks the partial last block

    spec = pl.BlockSpec((block_rows, lane_w), lambda i: (i, 0))
    out_sds = jax.ShapeDtypeStruct((rows, lane_w), dtype)

    o1, o2, o3, o4 = pl.pallas_call(
        _elementwise_kernel,
        out_shape=(out_sds, out_sds, out_sds, out_sds),
        grid=grid,
        in_specs=[spec],
        out_specs=(spec, spec, spec, spec),
        compiler_params=pltpu.CompilerParams(
            dimension_semantics=("parallel",),
            vmem_limit_bytes=28 * 1024 * 1024,
        ),
    )(x2d)

    if padded:
        def _unpack(o):
            return o.reshape(-1)[:n].reshape(orig_shape)
    else:
        def _unpack(o):
            return o.reshape(orig_shape)  # free: same element count, no copy

    return _unpack(o1), _unpack(o2), _unpack(o3), _unpack(o4)


if __name__ == "__main__":
    key = jax.random.PRNGKey(0)
    x = jax.random.normal(key, (2, 4, 16, 16), dtype=jnp.float32)

    x1, x2, x3, x4 = pt_module_forward(x)
    jax.block_until_ready((x1, x2, x3, x4))

    # correctness check against plain JAX reference
    assert x1.shape == x.shape and x1.dtype == x.dtype
    assert jnp.allclose(x1, x + 2), "x + 2 mismatch"
    assert jnp.allclose(x2, x - 3), "x - 3 mismatch"
    assert jnp.allclose(x3, x * 4), "x * 4 mismatch"
    assert jnp.allclose(x4, x / 5), "x / 5 mismatch"

    print("KERNEL_OK")
</pallas_src>

<mosaic_0001>
module attributes {stable_mosaic.version = 11 : i64} {
  func.func @_elementwise_kernel(%arg0: i32, %arg1: memref<1x2048xf32, #tpu.memory_space<vmem>>, %arg2: memref<1x2048xf32, #tpu.memory_space<vmem>>, %arg3: memref<1x2048xf32, #tpu.memory_space<vmem>>, %arg4: memref<1x2048xf32, #tpu.memory_space<vmem>>, %arg5: memref<1x2048xf32, #tpu.memory_space<vmem>>) attributes {dimension_semantics = [#tpu.dimension_semantics<parallel>], iteration_bounds = array<i64: 1>, scalar_prefetch = 0 : i64, scratch_operands = 0 : i64, tpu.core_type = #tpu.core_type<tc>, window_params = [{transform_indices = @transform_0, window_bounds = array<i64: 1, 2048>}, {transform_indices = @transform_1, window_bounds = array<i64: 1, 2048>}, {transform_indices = @transform_2, window_bounds = array<i64: 1, 2048>}, {transform_indices = @transform_3, window_bounds = array<i64: 1, 2048>}, {transform_indices = @transform_4, window_bounds = array<i64: 1, 2048>}]} {
    %c0 = arith.constant 0 : index
    %c0_0 = arith.constant 0 : index
    %0 = vector.load %arg1[%c0, %c0_0] : memref<1x2048xf32, #tpu.memory_space<vmem>>, vector<1x2048xf32>
    %cst = arith.constant 2.000000e+00 : f32
    %1 = vector.broadcast %cst : f32 to vector<1x2048xf32>
    %2 = arith.addf %0, %1 : vector<1x2048xf32>
    %c0_1 = arith.constant 0 : index
    %c0_2 = arith.constant 0 : index
    %3 = vector.load %arg2[%c0_1, %c0_2] : memref<1x2048xf32, #tpu.memory_space<vmem>>, vector<1x2048xf32>
    tpu.vector_store %arg2[%c0_1, %c0_2], %2 {strides = array<i32>} : memref<1x2048xf32, #tpu.memory_space<vmem>>, vector<1x2048xf32>,
    %cst_3 = arith.constant 3.000000e+00 : f32
    %4 = vector.broadcast %cst_3 : f32 to vector<1x2048xf32>
    %5 = arith.subf %0, %4 : vector<1x2048xf32>
    %c0_4 = arith.constant 0 : index
    %c0_5 = arith.constant 0 : index
    %6 = vector.load %arg3[%c0_4, %c0_5] : memref<1x2048xf32, #tpu.memory_space<vmem>>, vector<1x2048xf32>
    tpu.vector_store %arg3[%c0_4, %c0_5], %5 {strides = array<i32>} : memref<1x2048xf32, #tpu.memory_space<vmem>>, vector<1x2048xf32>,
    %cst_6 = arith.constant 4.000000e+00 : f32
    %7 = vector.broadcast %cst_6 : f32 to vector<1x2048xf32>
    %8 = arith.mulf %0, %7 : vector<1x2048xf32>
    %c0_7 = arith.constant 0 : index
    %c0_8 = arith.constant 0 : index
    %9 = vector.load %arg4[%c0_7, %c0_8] : memref<1x2048xf32, #tpu.memory_space<vmem>>, vector<1x2048xf32>
    tpu.vector_store %arg4[%c0_7, %c0_8], %8 {strides = array<i32>} : memref<1x2048xf32, #tpu.memory_space<vmem>>, vector<1x2048xf32>,
    %cst_9 = arith.constant 5.000000e+00 : f32
    %10 = vector.broadcast %cst_9 : f32 to vector<1x2048xf32>
    %11 = arith.divf %0, %10 : vector<1x2048xf32>
    %c0_10 = arith.constant 0 : index
    %c0_11 = arith.constant 0 : index
    %12 = vector.load %arg5[%c0_10, %c0_11] : memref<1x2048xf32, #tpu.memory_space<vmem>>, vector<1x2048xf32>
    tpu.vector_store %arg5[%c0_10, %c0_11], %11 {strides = array<i32>} : memref<1x2048xf32, #tpu.memory_space<vmem>>, vector<1x2048xf32>,
    return
  }
  func.func @transform_0(%arg0: i32) -> (i32, i32) {
    %c0_i32 = arith.constant 0 : i32
    %c0_i32_0 = arith.constant 0 : i32
    return %arg0, %c0_i32 : i32, i32
  }
  func.func @transform_1(%arg0: i32) -> (i32, i32) {
    %c0_i32 = arith.constant 0 : i32
    %c0_i32_0 = arith.constant 0 : i32
    return %arg0, %c0_i32 : i32, i32
  }
  func.func @transform_2(%arg0: i32) -> (i32, i32) {
    %c0_i32 = arith.constant 0 : i32
    %c0_i32_0 = arith.constant 0 : i32
    return %arg0, %c0_i32 : i32, i32
  }
  func.func @transform_3(%arg0: i32) -> (i32, i32) {
    %c0_i32 = arith.constant 0 : i32
    %c0_i32_0 = arith.constant 0 : i32
    return %arg0, %c0_i32 : i32, i32
  }
  func.func @transform_4(%arg0: i32) -> (i32, i32) {
    %c0_i32 = arith.constant 0 : i32
    %c0_i32_0 = arith.constant 0 : i32
    return %arg0, %c0_i32 : i32, i32
  }
}

</mosaic_0001>

<llo_original>
// kernel: pt_module_forward.1
$region0: #{pt_module_forward.1}
  #allocation0 [shape = 'u32[]', space=smem, size = 0x4, offset = 0x4, fixed_abs, tag = 'smem constant byte address 0x4 - core index']
  #allocation1 [shape = 'u32[144,128]{1,0:T(1,128)}', space=vmem, size = 0x12000, scoped, tag = 'internal scratch']
  %s0 = inlined_call_operand.vmem [shape: f32[1,2048], index: 0, kind: input, shape index: {}]
  %s1 = inlined_call_operand.vmem [shape: f32[1,2048], index: 1, kind: output, shape index: {0}]
  %s2 = inlined_call_operand.vmem [shape: f32[1,2048], index: 2, kind: output, shape index: {1}]
  %s3 = inlined_call_operand.vmem [shape: f32[1,2048], index: 3, kind: output, shape index: {2}]
  %s4 = inlined_call_operand.vmem [shape: f32[1,2048], index: 4, kind: output, shape index: {3}]
  %5 = xla_tuple %s1, %s2, %s3, %s4
  %s6 = sld [smem:[#allocation0]]
  $region38: #{pt_module_forward.1} parent=0
    _
  %s8 = ssub.s32 1, %s6
  %s9 = scalar_select 0, %s8, %s6
  // Predicated region
  $region2: #{pt_module_forward.1} parent=0 // pred_check
    _
  $region3: #{pt_module_forward.1} parent=0 // pred_check_branch
    %11 = sbr.rel (0) target = $region5
  $region4: #{pt_module_forward.1} parent=0 // pred_region
    _
  $region5: #{pt_module_forward.1} parent=0 // pred_fallthru
    _
  %v12 = vld [vmem:[%s0] sm:$0xff]
  %v13 = vld [vmem:[%s0 + $0x8] sm:$0xff]
  %v14 = vadd.f32 %v12, 2.0
  %v15 = vadd.f32 %v13, 2.0
  %16 = vst [vmem:[%s1] sm:$0xff] %v14
  %17 = vst [vmem:[%s1 + $0x8] sm:$0xff] %v15
  %v18 = vsub.f32 %v12, 3.0
  %v19 = vsub.f32 %v13, 3.0
  %20 = vst [vmem:[%s2] sm:$0xff] %v18
  %21 = vst [vmem:[%s2 + $0x8] sm:$0xff] %v19
  %v22 = vmul.f32 %v12, 4.0
  %v23 = vmul.f32 %v13, 4.0
  %24 = vst [vmem:[%s3] sm:$0xff] %v22
  %25 = vst [vmem:[%s3 + $0x8] sm:$0xff] %v23
  %v26 = vrcp.pop 5.0
  %v27 = vmul.f32 %v12, %v26
  %v28 = vmul.f32 %v13, %v26
  %29 = vst [vmem:[%s4] sm:$0xff] %v27
  %30 = vst [vmem:[%s4 + $0x8] sm:$0xff] %v28
  // Predicated region
  $region6: #{pt_module_forward.1} parent=0 // pred_check
    _
  $region7: #{pt_module_forward.1} parent=0 // pred_check_branch
    %32 = sbr.rel (0) target = $region9
  $region8: #{pt_module_forward.1} parent=0 // pred_region
    _
  $region9: #{pt_module_forward.1} parent=0 // pred_fallthru
    _
  // Predicated region
  $region10: #{pt_module_forward.1} parent=0 // pred_check
    _
  $region11: #{pt_module_forward.1} parent=0 // pred_check_branch
    %34 = sbr.rel (0) target = $region13
  $region12: #{pt_module_forward.1} parent=0 // pred_region
    _
  $region13: #{pt_module_forward.1} parent=0 // pred_fallthru
    _
  // Predicated region
  $region14: #{pt_module_forward.1} parent=0 // pred_check
    _
  $region15: #{pt_module_forward.1} parent=0 // pred_check_branch
    %36 = sbr.rel (0) target = $region17
  $region16: #{pt_module_forward.1} parent=0 // pred_region
    _
  $region17: #{pt_module_forward.1} parent=0 // pred_fallthru
    _
  // Predicated region
  $region18: #{pt_module_forward.1} parent=0 // pred_check
    _
  $region19: #{pt_module_forward.1} parent=0 // pred_check_branch
    %38 = sbr.rel (0) target = $region21
  $region20: #{pt_module_forward.1} parent=0 // pred_region
    _
  $region21: #{pt_module_forward.1} parent=0 // pred_fallthru
    _
  // Predicated region
  $region22: #{pt_module_forward.1} parent=0 // pred_check
    _
  $region23: #{pt_module_forward.1} parent=0 // pred_check_branch
    %40 = sbr.rel (0) target = $region25
  $region24: #{pt_module_forward.1} parent=0 // pred_region
    _
  $region25: #{pt_module_forward.1} parent=0 // pred_fallthru
    _
  // Predicated region
  $region26: #{pt_module_forward.1} parent=0 // pred_check
    _
  $region27: #{pt_module_forward.1} parent=0 // pred_check_branch
    %42 = sbr.rel (0) target = $region29
  $region28: #{pt_module_forward.1} parent=0 // pred_region
    _
  $region29: #{pt_module_forward.1} parent=0 // pred_fallthru
    _
  // Predicated region
  $region30: #{pt_module_forward.1} parent=0 // pred_check
    _
  $region31: #{pt_module_forward.1} parent=0 // pred_check_branch
    %44 = sbr.rel (0) target = $region33
  $region32: #{pt_module_forward.1} parent=0 // pred_region
    _
  $region33: #{pt_module_forward.1} parent=0 // pred_fallthru
    _
  // Predicated region
  $region34: #{pt_module_forward.1} parent=0 // pred_check
    _
  $region35: #{pt_module_forward.1} parent=0 // pred_check_branch
    %46 = sbr.rel (0) target = $region37
  $region36: #{pt_module_forward.1} parent=0 // pred_region
    _
  $region37: #{pt_module_forward.1} parent=0 // pred_fallthru
    _

</llo_original>
